<compile_context>
chip_gen: v6e
topology: v6e:2x2x1
jax: 0.10.0
libtpu: 0.0.40
codegen_flags: <defaults>
</compile_context>

<pallas_src>
import functools

import jax
import jax.numpy as jnp
from jax.experimental import pallas as pl
from jax.experimental.pallas import tpu as pltpu


# ---------------------------------------------------------------------------
# Constants / helpers
# ---------------------------------------------------------------------------

_LANE = 128
_VMEM_LIMIT = 48 * 1024 * 1024          # v7x-safe (64 MiB/TC physical)
_RESIDENT_G_BUDGET = 24 * 1024 * 1024   # double-buffered resident g slab cap


def _round_up(n, m):
    return ((n + m - 1) // m) * m


def _pad2(a, rows, cols, fill=0.0):
    return jnp.pad(a, ((0, rows - a.shape[0]), (0, cols - a.shape[1])),
                   constant_values=fill)


def _pick_row_tile(n, want=512):
    """Largest 'nice' row tile <= want such that there are >= 2 row tiles
    (keeps the parallel axis shardable across v7x's two TensorCores)."""
    for t in (1024, 512, 256, 128):
        if t <= want and _round_up(n, t) >= 2 * t:
            return t
    return _LANE


def _pick_k_tile(np_, want=512):
    """Largest multiple of 128 that divides Np and is <= want."""
    t = max(_LANE, min((want // _LANE) * _LANE, np_))
    while t > _LANE and np_ % t:
        t -= _LANE
    return t


# ---------------------------------------------------------------------------
# Kernels
# ---------------------------------------------------------------------------

def _linear_kernel(x_ref, w_ref, b_ref, out_ref):
    """g = x @ W + b   (x tile [TM, Fp] bf16, W resident [Fp, Hp] bf16)."""
    acc = jnp.dot(x_ref[...], w_ref[...], preferred_element_type=jnp.float32)
    out_ref[...] = (acc + b_ref[...]).astype(out_ref.dtype)


def _prop_linear_kernel(adj_ref, g_ref, w_ref, b_ref, out_ref, acc_ref,
                        *, k_tile, g_resident):
    """out = relu(adj @ g) @ W + b, reduction over the node-column (k) axis.

    Grid = (row tiles, k tiles); acc_ref is a resident f32 VMEM accumulator.
    If g_resident, g_ref is the full (Np, Hp) slab kept in VMEM and we slice
    the k-chunk out of it; otherwise g_ref is the per-k block.
    """
    k = pl.program_id(1)

    @pl.when(k == 0)
    def _():
        acc_ref[...] = jnp.zeros_like(acc_ref)

    if g_resident:
        start = pl.multiple_of(k * k_tile, k_tile)
        g_blk = g_ref[pl.ds(start, k_tile), :]
    else:
        g_blk = g_ref[...]

    acc_ref[...] += jnp.dot(adj_ref[...], g_blk,
                            preferred_element_type=jnp.float32)

    @pl.when(k == pl.num_programs(1) - 1)
    def _():
        h = jnp.maximum(acc_ref[...], 0.0)                       # f32 ReLU
        y = jnp.dot(h.astype(jnp.bfloat16), w_ref[...],
                    preferred_element_type=jnp.float32) + b_ref[...]
        out_ref[...] = y.astype(out_ref.dtype)


def _prop_linear_lsm_kernel(adj_ref, g_ref, w_ref, b_ref,
                            logp_ref, t_ref, acc_ref, *, k_tile, g_resident):
    """t = relu(adj @ g);  logp = log_softmax(t @ W3 + b3).

    Class axis is lane-padded to 128: padded W3 columns are 0 and padded b3
    entries are -1e30, so padded classes contribute exactly 0 (in f32).
    """
    k = pl.program_id(1)

    @pl.when(k == 0)
    def _():
        acc_ref[...] = jnp.zeros_like(acc_ref)

    if g_resident:
        start = pl.multiple_of(k * k_tile, k_tile)
        g_blk = g_ref[pl.ds(start, k_tile), :]
    else:
        g_blk = g_ref[...]

    acc_ref[...] += jnp.dot(adj_ref[...], g_blk,
                            preferred_element_type=jnp.float32)

    @pl.when(k == pl.num_programs(1) - 1)
    def _():
        t = jnp.maximum(acc_ref[...], 0.0)                       # f32 ReLU
        logits = jnp.dot(t.astype(jnp.bfloat16), w_ref[...],
                         preferred_element_type=jnp.float32) + b_ref[...]
        m = jnp.max(logits, axis=-1, keepdims=True)
        shifted = logits - m
        lse = jnp.log(jnp.sum(jnp.exp(shifted), axis=-1, keepdims=True))
        logp_ref[...] = (shifted - lse).astype(logp_ref.dtype)
        t_ref[...] = t.astype(t_ref.dtype)


# ---------------------------------------------------------------------------
# Wrapper
# ---------------------------------------------------------------------------

def gnn_forward(x_in, adj, params, *, row_tile=512, k_tile=512):
    """Forward pass matching the PyTorch GNN module.

    x_in : [N, n_feat] f32,  adj : [N, N] f32
    params: w1 [F,H1], b1 [1,H1], w2 [H1,H2], b2 [1,H2], w3 [H2,C], b3 [1,C]
    Returns (log_softmax(logits) [N, C], t [N, H2]).
    """
    N, F = x_in.shape
    H1 = params["w1"].shape[1]
    H2 = params["w2"].shape[1]
    C = params["w3"].shape[1]

    rt = _pick_row_tile(N, row_tile)
    Np = _round_up(N, rt)
    kt = _pick_k_tile(Np, k_tile)

    Fp = _round_up(F, _LANE)
    H1p = _round_up(H1, _LANE)
    H2p = _round_up(H2, _LANE)
    Cp = _round_up(C, _LANE)

    # Lane-pad everything; MXU operands narrowed to bf16, biases kept f32.
    x_p = _pad2(x_in, Np, Fp).astype(jnp.bfloat16)
    adj_p = _pad2(adj, Np, Np).astype(jnp.bfloat16)
    w1_p = _pad2(params["w1"], Fp, H1p).astype(jnp.bfloat16)
    w2_p = _pad2(params["w2"], H1p, H2p).astype(jnp.bfloat16)
    w3_p = _pad2(params["w3"], H2p, Cp).astype(jnp.bfloat16)
    b1_p = _pad2(params["b1"], 1, H1p).astype(jnp.float32)
    b2_p = _pad2(params["b2"], 1, H2p).astype(jnp.float32)
    # padded classes get a huge negative bias -> exp() underflows to exactly 0
    b3_p = _pad2(params["b3"], 1, Cp, fill=-1e30).astype(jnp.float32)

    grid_rows = Np // rt
    grid_k = Np // kt

    # Keep g1/g2 VMEM-resident (fetched once) when the double-buffered slab
    # fits the budget; otherwise stream per-k blocks (old behaviour).
    g1_res = 2 * Np * H1p * 2 <= _RESIDENT_G_BUDGET
    g2_res = 2 * Np * H2p * 2 <= _RESIDENT_G_BUDGET

    # ---- stage 1: g1 = x @ W1 + b1  (row-tiled, weights resident) ----------
    g1 = pl.pallas_call(
        _linear_kernel,
        out_shape=jax.ShapeDtypeStruct((Np, H1p), jnp.bfloat16),
        grid_spec=pltpu.PrefetchScalarGridSpec(
            num_scalar_prefetch=0,
            grid=(grid_rows,),
            in_specs=[
                pl.BlockSpec((rt, Fp), lambda i: (i, 0)),
                pl.BlockSpec((Fp, H1p), lambda i: (0, 0)),
                pl.BlockSpec((1, H1p), lambda i: (0, 0)),
            ],
            out_specs=pl.BlockSpec((rt, H1p), lambda i: (i, 0))),
        compiler_params=pltpu.CompilerParams(
            dimension_semantics=("parallel",),
            vmem_limit_bytes=_VMEM_LIMIT),
    )(x_p, w1_p, b1_p)

    # ---- stage 2: g2 = relu(adj @ g1) @ W2 + b2 -----------------------------
    adj_spec = pl.BlockSpec((rt, kt), lambda i, k: (i, k),
                            pipeline_mode=pl.Buffered(3))
    g1_spec = (pl.BlockSpec((Np, H1p), lambda i, k: (0, 0)) if g1_res
               else pl.BlockSpec((kt, H1p), lambda i, k: (k, 0)))

    g2 = pl.pallas_call(
        functools.partial(_prop_linear_kernel, k_tile=kt, g_resident=g1_res),
        out_shape=jax.ShapeDtypeStruct((Np, H2p), jnp.bfloat16),
        grid_spec=pltpu.PrefetchScalarGridSpec(
            num_scalar_prefetch=0,
            grid=(grid_rows, grid_k),
            in_specs=[
                adj_spec,                                          # adj tile
                g1_spec,                                           # g1 (resident)
                pl.BlockSpec((H1p, H2p), lambda i, k: (0, 0)),     # W2 resident
                pl.BlockSpec((1, H2p), lambda i, k: (0, 0)),       # b2 resident
            ],
            out_specs=pl.BlockSpec((rt, H2p), lambda i, k: (i, 0)),
            scratch_shapes=[pltpu.VMEM((rt, H1p), jnp.float32)]),
        compiler_params=pltpu.CompilerParams(
            dimension_semantics=("parallel", "arbitrary"),
            vmem_limit_bytes=_VMEM_LIMIT),
    )(adj_p, g1, w2_p, b2_p)

    # ---- stage 3: t = relu(adj @ g2); logp = log_softmax(t @ W3 + b3) -------
    g2_spec = (pl.BlockSpec((Np, H2p), lambda i, k: (0, 0)) if g2_res
               else pl.BlockSpec((kt, H2p), lambda i, k: (k, 0)))

    logp_p, t_p = pl.pallas_call(
        functools.partial(_prop_linear_lsm_kernel, k_tile=kt, g_resident=g2_res),
        out_shape=(jax.ShapeDtypeStruct((Np, Cp), jnp.float32),
                   jax.ShapeDtypeStruct((Np, H2p), jnp.float32)),
        grid_spec=pltpu.PrefetchScalarGridSpec(
            num_scalar_prefetch=0,
            grid=(grid_rows, grid_k),
            in_specs=[
                adj_spec,                                          # adj tile
                g2_spec,                                           # g2 (resident)
                pl.BlockSpec((H2p, Cp), lambda i, k: (0, 0)),      # W3 resident
                pl.BlockSpec((1, Cp), lambda i, k: (0, 0)),        # b3 resident
            ],
            out_specs=[pl.BlockSpec((rt, Cp), lambda i, k: (i, 0)),
                       pl.BlockSpec((rt, H2p), lambda i, k: (i, 0))],
            scratch_shapes=[pltpu.VMEM((rt, H2p), jnp.float32)]),
        compiler_params=pltpu.CompilerParams(
            dimension_semantics=("parallel", "arbitrary"),
            vmem_limit_bytes=_VMEM_LIMIT),
    )(adj_p, g2, w3_p, b3_p)

    # slice the lane/row padding back off
    return logp_p[:N, :C], t_p[:N, :H2]


# ---------------------------------------------------------------------------
# Params / reference / demo
# ---------------------------------------------------------------------------

def init_params(key, n_feat, n_hidden_1, n_hidden_2, n_class):
    """Deterministic synthetic parameter init (PyTorch-Linear-like uniform).
    Weights stored transposed vs PyTorch as [in, out] so kernels do x @ W + b."""
    ks = jax.random.split(key, 6)

    def linear(kw, kb, fan_in, fan_out):
        bound = 1.0 / jnp.sqrt(fan_in)
        w = jax.random.uniform(kw, (fan_in, fan_out), jnp.float32, -bound, bound)
        b = jax.random.uniform(kb, (1, fan_out), jnp.float32, -bound, bound)
        return w, b

    w1, b1 = linear(ks[0], ks[1], n_feat, n_hidden_1)
    w2, b2 = linear(ks[2], ks[3], n_hidden_1, n_hidden_2)
    w3, b3 = linear(ks[4], ks[5], n_hidden_2, n_class)
    return {"w1": w1, "b1": b1, "w2": w2, "b2": b2, "w3": w3, "b3": b3}


def _reference(x_in, adj, p):
    """Pure-JAX reference mirroring the kernel's bf16-operand / f32-accumulate
    pipeline (so the comparison only sees accumulation-order differences).
    Note: deviation from the original f32 PyTorch model is larger than this."""
    bf = lambda a: a.astype(jnp.bfloat16).astype(jnp.float32)
    xb, adjb = bf(x_in), bf(adj)
    w1, w2, w3 = bf(p["w1"]), bf(p["w2"]), bf(p["w3"])

    g1 = bf(xb @ w1 + p["b1"])                # stage-1 output stored as bf16
    h1 = jnp.maximum(adjb @ g1, 0.0)
    g2 = bf(bf(h1) @ w2 + p["b2"])            # stage-2 output stored as bf16
    t = jnp.maximum(adjb @ g2, 0.0)
    logits = bf(t) @ w3 + p["b3"]
    return jax.nn.log_softmax(logits, axis=1), t


if __name__ == "__main__":
    # Lane-friendly but still small: 512 nodes, 128 features/hidden, 8 classes.
    # (row tile auto-selects 256 -> grid_rows = 2, even, so v7x megacore
    #  keeps both TensorCores busy.)
    N = 512
    n_feat, n_hidden_1, n_hidden_2, n_class = 128, 128, 128, 8

    key = jax.random.PRNGKey(0)
    k_x, k_adj, k_p = jax.random.split(key, 3)

    x_in = jax.random.normal(k_x, (N, n_feat), jnp.float32)
    a = jax.random.uniform(k_adj, (N, N), jnp.float32)
    adj = (a + a.T) / (2.0 * N)          # symmetric, roughly normalized

    params = init_params(k_p, n_feat, n_hidden_1, n_hidden_2, n_class)

    log_probs, t = gnn_forward(x_in, adj, params)
    jax.block_until_ready((log_probs, t))

    ref_lp, ref_t = _reference(x_in, adj, params)
    assert log_probs.shape == (N, n_class) and t.shape == (N, n_hidden_2)
    assert bool(jnp.all(jnp.isfinite(log_probs)))
    assert jnp.allclose(log_probs, ref_lp, atol=1e-3, rtol=1e-3)
    assert jnp.allclose(t, ref_t, atol=1e-3, rtol=1e-3)

    print("KERNEL_OK")
</pallas_src>

<mosaic_0001>
module attributes {stable_mosaic.version = 11 : i64} {
  func.func @_linear_kernel(%arg0: i32, %arg1: memref<256x128xbf16, #tpu.memory_space<vmem>>, %arg2: memref<128x128xbf16, #tpu.memory_space<vmem>>, %arg3: memref<1x128xf32, #tpu.memory_space<vmem>>, %arg4: memref<256x128xbf16, #tpu.memory_space<vmem>>) attributes {dimension_semantics = [#tpu.dimension_semantics<parallel>], iteration_bounds = array<i64: 2>, scalar_prefetch = 0 : i64, scratch_operands = 0 : i64, tpu.core_type = #tpu.core_type<tc>, window_params = [{transform_indices = @transform_0, window_bounds = array<i64: 256, 128>}, {pipeline_mode = #tpu.pipeline_mode<synchronous>, transform_indices = @transform_1, window_bounds = array<i64: 128, 128>}, {pipeline_mode = #tpu.pipeline_mode<synchronous>, transform_indices = @transform_2, window_bounds = array<i64: 1, 128>}, {transform_indices = @transform_3, window_bounds = array<i64: 256, 128>}]} {
    %c0 = arith.constant 0 : index
    %c0_0 = arith.constant 0 : index
    %0 = vector.load %arg1[%c0, %c0_0] : memref<256x128xbf16, #tpu.memory_space<vmem>>, vector<256x128xbf16>
    %c0_1 = arith.constant 0 : index
    %c0_2 = arith.constant 0 : index
    %1 = vector.load %arg2[%c0_1, %c0_2] : memref<128x128xbf16, #tpu.memory_space<vmem>>, vector<128x128xbf16>
    %cst = arith.constant dense<0.000000e+00> : vector<256x128xf32>
    %2 = tpu.matmul %0, %1, %cst {dimension_numbers = #tpu.dot_dimension_numbers<[1], [0], [0], [1], [0, 0, 1, 1], [], []>} : vector<256x128xbf16>, vector<128x128xbf16>, vector<256x128xf32> -> vector<256x128xf32>
    %c0_3 = arith.constant 0 : index
    %c0_4 = arith.constant 0 : index
    %3 = vector.load %arg3[%c0_3, %c0_4] : memref<1x128xf32, #tpu.memory_space<vmem>>, vector<1x128xf32>
    %4 = vector.broadcast %3 : vector<1x128xf32> to vector<256x128xf32>
    %5 = arith.addf %2, %4 : vector<256x128xf32>
    %6 = arith.truncf %5 : vector<256x128xf32> to vector<256x128xbf16>
    %c0_5 = arith.constant 0 : index
    %c0_6 = arith.constant 0 : index
    %7 = vector.load %arg4[%c0_5, %c0_6] : memref<256x128xbf16, #tpu.memory_space<vmem>>, vector<256x128xbf16>
    tpu.vector_store %arg4[%c0_5, %c0_6], %6 {strides = array<i32>} : memref<256x128xbf16, #tpu.memory_space<vmem>>, vector<256x128xbf16>,
    return
  }
  func.func @transform_0(%arg0: i32) -> (i32, i32) {
    %c0_i32 = arith.constant 0 : i32
    %c0_i32_0 = arith.constant 0 : i32
    return %arg0, %c0_i32 : i32, i32
  }
  func.func @transform_1(%arg0: i32) -> (i32, i32) {
    %c0_i32 = arith.constant 0 : i32
    %c0_i32_0 = arith.constant 0 : i32
    %c0_i32_1 = arith.constant 0 : i32
    return %c0_i32, %c0_i32_0 : i32, i32
  }
  func.func @transform_2(%arg0: i32) -> (i32, i32) {
    %c0_i32 = arith.constant 0 : i32
    %c0_i32_0 = arith.constant 0 : i32
    %c0_i32_1 = arith.constant 0 : i32
    return %c0_i32, %c0_i32_0 : i32, i32
  }
  func.func @transform_3(%arg0: i32) -> (i32, i32) {
    %c0_i32 = arith.constant 0 : i32
    %c0_i32_0 = arith.constant 0 : i32
    return %arg0, %c0_i32 : i32, i32
  }
}

</mosaic_0001>

<llo_original>
// kernel: tpu_custom_call.1
$region0: #{tpu_custom_call.1}
  #allocation0 [shape = 'u32[]', space=smem, size = 0x4, offset = 0x4, fixed_abs, tag = 'smem constant byte address 0x4 - core index']
  #allocation1 [shape = 'u32[144,128]{1,0:T(1,128)}', space=vmem, size = 0x12000, scoped, tag = 'internal scratch']
  %s0 = inlined_call_operand.hbm [shape: bf16[512,128], index: 0, kind: input, shape index: {}]
  %s1 = inlined_call_operand.hbm [shape: bf16[128,128], index: 1, kind: input, shape index: {}]
  %s2 = inlined_call_operand.vmem [shape: f32[1,128], index: 2, kind: input, shape index: {}]
  %s3 = inlined_call_operand.hbm [shape: bf16[512,128], index: 3, kind: output, shape index: {}]
  %s4 = sld [smem:[#allocation0]]
  $region53: #{tpu_custom_call.1} parent=0
    _
  %s6 = ssub.s32 1, %s4
  %s7 = scalar_select 0, %s6, %s4
  $region1: #{tpu_custom_call.1} parent=0
    #allocation2 [shape = 'u8[131072]{0}', space=vmem, size = 0x20000, scoped, tag = 'input window, operand 0']
    #allocation3 [shape = 's32[2]{0}', space=sflag, size = 0x8, scoped, tag = 'scoped memory for tpu_custom_call.1']
    #allocation4 [shape = 's32[2]{0}', space=sflag, size = 0x8, scoped, tag = 'scoped memory for tpu_custom_call.1']
    #allocation5 [shape = 'u8[32768]{0}', space=vmem, size = 0x8000, scoped, tag = 'input window, operand 1, single buffered']
    #allocation6 [shape = 's32[1]{0}', space=sflag, size = 0x4, scoped, tag = 'scoped memory for tpu_custom_call.1']
    #allocation7 [shape = 'u8[131072]{0}', space=vmem, size = 0x20000, scoped, tag = 'output window, operand 0']
    %8 = vsyncpa [#allocation3], 0
    %s9 = scalar_lea.sflag [#allocation3], 1
    %10 = vsyncpa %s9, 0
    %11 = vsyncpa [#allocation6], 0
    %12 = vsyncpa [#allocation4], 0
    %s13 = scalar_lea.sflag [#allocation4], 1
    %14 = vsyncpa %s13, 0
    loop: start=0, step=1, limit=4
    $region2: #{tpu_custom_call.1} parent=1 // loop_pre_header
      _
    $region3: #{tpu_custom_call.1} parent=1 // loop_header
      %s16 = sphi 0, %s20
      %p17 = scmp.ge.s32.totalorder %s16, 4
      %s26 = sphi 0, %s28
      %s29 = sphi 0, %s26
      %s30 = sphi 0, %s29
      %s46 = sphi 0, %s30
      %s50 = sphi 0, %s50
      %s52 = sphi 0, %s50
      %s53 = sphi 0, %s52
      %s67 = sphi 0, %s53
      %s71 = sphi 0, %s71
      %s73 = sphi 0, %s71
      %s74 = sphi 0, %s73
      %s88 = sphi 0, %s74
      %s94 = sphi 0, %s96
      %s97 = sphi 0, %s94
      %s98 = sphi 0, %s97
      %s114 = sphi 0, %s98
    $region4: #{tpu_custom_call.1} parent=1 // loop_header_branch
      %19 = sbr.rel (%p17) target = $region8
    $region5: #{tpu_custom_call.1} parent=1 // loop_body
      %s21 = ssub.s32 %s16, 1
      %s22 = ssub.s32 %s16, 2
      %s23 = sadd.s32 %s16, 1
      %s24 = ssub.s32 %s16, %s23
      %p25 = scmp.eq.s32.totalorder %s24, 0
      %s27 = sadd.s32 %s26, 1
      %s28 = scalar_select %p25, %s26, %s27
      %p31 = pneg %p25
      %p32 = scmp.eq.s32.totalorder %s16, 1
      %p33 = por %p31, %p32
      %p34 = scmp.ne.s32.totalorder %s26, %s29
      %p35 = scmp.eq.s32.totalorder %s16, 0
      %p36 = por %p34, %p35
      %p37 = scmp.ne.s32.totalorder %s26, %s29
      %p38 = scmp.eq.s32.totalorder %s21, 1
      %p39 = por %p37, %p38
      %p40 = scmp.ne.s32.totalorder %s29, %s30
      %p41 = scmp.eq.s32.totalorder %s21, 0
      %p42 = por %p40, %p41
      %p43 = scmp.ne.s32.totalorder %s29, %s30
      %p44 = scmp.eq.s32.totalorder %s22, 1
      %p45 = por %p43, %p44
      %p47 = scmp.ne.s32.totalorder %s30, %s46
      %p48 = scmp.eq.s32.totalorder %s22, 0
      %p49 = por %p47, %p48
      %s51 = sadd.s32 %s50, 1
      %p54 = scmp.eq.s32.totalorder %s16, 1
      %p55 = scmp.ne.s32.totalorder %s50, %s52
      %p56 = scmp.eq.s32.totalorder %s16, 0
      %p57 = por %p55, %p56
      %p58 = scmp.ne.s32.totalorder %s50, %s52
      %p59 = scmp.eq.s32.totalorder %s21, 1
      %p60 = por %p58, %p59
      %p61 = scmp.ne.s32.totalorder %s52, %s53
      %p62 = scmp.eq.s32.totalorder %s21, 0
      %p63 = por %p61, %p62
      %p64 = scmp.ne.s32.totalorder %s52, %s53
      %p65 = scmp.eq.s32.totalorder %s22, 1
      %p66 = por %p64, %p65
      %p68 = scmp.ne.s32.totalorder %s53, %s67
      %p69 = scmp.eq.s32.totalorder %s22, 0
      %p70 = por %p68, %p69
      %s72 = sadd.s32 %s71, 1
      %p75 = scmp.eq.s32.totalorder %s16, 1
      %p76 = scmp.ne.s32.totalorder %s71, %s73
      %p77 = scmp.eq.s32.totalorder %s16, 0
      %p78 = por %p76, %p77
      %p79 = scmp.ne.s32.totalorder %s71, %s73
      %p80 = scmp.eq.s32.totalorder %s21, 1
      %p81 = por %p79, %p80
      %p82 = scmp.ne.s32.totalorder %s73, %s74
      %p83 = scmp.eq.s32.totalorder %s21, 0
      %p84 = por %p82, %p83
      %p85 = scmp.ne.s32.totalorder %s73, %s74
      %p86 = scmp.eq.s32.totalorder %s22, 1
      %p87 = por %p85, %p86
      %p89 = scmp.ne.s32.totalorder %s74, %s88
      %p90 = scmp.eq.s32.totalorder %s22, 0
      %p91 = por %p89, %p90
      %s92 = ssub.s32 %s16, %s23
      %p93 = scmp.eq.s32.totalorder %s92, 0
      %s95 = sadd.s32 %s94, 1
      %s96 = scalar_select %p93, %s94, %s95
      %p99 = pneg %p93
      %p100 = scmp.eq.s32.totalorder %s16, 1
      %p101 = por %p99, %p100
      %p102 = scmp.ne.s32.totalorder %s94, %s97
      %p103 = scmp.eq.s32.totalorder %s16, 0
      %p104 = por %p102, %p103
      %p105 = scmp.ne.s32.totalorder %s94, %s97
      %p106 = scmp.eq.s32.totalorder %s21, 1
      %p107 = por %p105, %p106
      %p108 = scmp.ne.s32.totalorder %s97, %s98
      %p109 = scmp.eq.s32.totalorder %s21, 0
      %p110 = por %p108, %p109
      %p111 = scmp.ne.s32.totalorder %s97, %s98
      %p112 = scmp.eq.s32.totalorder %s22, 1
      %p113 = por %p111, %p112
      %p115 = scmp.ne.s32.totalorder %s98, %s114
      %p116 = scmp.eq.s32.totalorder %s22, 0
      %p117 = por %p115, %p116
      %p118 = scmp.le.s32.totalorder 1, %s16
      %p119 = scmp.lt.s32.totalorder %s16, 3
      %p120 = pnand %p118, %p119
      %p121 = pneg %p120
      // Predicated region
      $region9: #{tpu_custom_call.1} parent=5 // pred_check
        _
      $region10: #{tpu_custom_call.1} parent=5 // pred_check_branch
        %123 = sbr.rel (%p120) target = $region12
      $region11: #{tpu_custom_call.1} parent=5 // pred_region
        %s124 = ssub.s32 %s16, 1
        // Predicated region
        $region13: #{tpu_custom_call.1} parent=11 // pred_check
          %p125 = pneg %p63
        $region14: #{tpu_custom_call.1} parent=11 // pred_check_branch
          %127 = sbr.rel (%p125) target = $region16
        $region15: #{tpu_custom_call.1} parent=11 // pred_region
          %s129 = ssub.s32 1024, 1024
          %130 = vsyncadd [#allocation6], %s129
          %s131 = sshll.u32 [#allocation5], 4
          %s132 = int_to_ptr.vmem [resolvable:$true] %s131
          %137 = dma.hbm_to_vmem [thread:$0]  %s1, 1024, %s132, [#allocation6], 64, 64, 4
        $region16: #{tpu_custom_call.1} parent=11 // pred_fallthru
          _
        // Predicated region
        $region17: #{tpu_custom_call.1} parent=11 // pred_check
          %p138 = pneg %p84
        $region18: #{tpu_custom_call.1} parent=11 // pred_check_branch
          %140 = sbr.rel (%p138) target = $region20
        $region19: #{tpu_custom_call.1} parent=11 // pred_region
          _
        $region20: #{tpu_custom_call.1} parent=11 // pred_fallthru
          _
      $region12: #{tpu_custom_call.1} parent=5 // pred_fallthru
        _
      %p141 = scmp.lt.s32.totalorder %s16, 2
      // Predicated region
      $region21: #{tpu_custom_call.1} parent=5 // pred_check
        %p142 = pneg %p141
      $region22: #{tpu_custom_call.1} parent=5 // pred_check_branch
        %144 = sbr.rel (%p142) target = $region24
      $region23: #{tpu_custom_call.1} parent=5 // pred_region
        // Predicated region
        $region25: #{tpu_custom_call.1} parent=23 // pred_check
          %p145 = pneg %p36
        $region26: #{tpu_custom_call.1} parent=23 // pred_check_branch
          %147 = sbr.rel (%p145) target = $region28
        $region27: #{tpu_custom_call.1} parent=23 // pred_region
          %s148 = sand.u32 %s26, 1
          %s149 = scalar_lea.sflag [#allocation3], %s148
          %s150 = sand.u32 %s26, 1
          %s151 = smul.addr %s150, 128
          %s152 = scalar_lea.vmem [#allocation2], %s151
          %s153 = smul.u32 32, %s16
          %s155 = ssub.s32 2048, 2048
          %156 = vsyncadd %s149, %s155
          %s157 = smul.addr %s153, 64
          %s158 = scalar_lea.hbm %s0, %s157
          %s159 = sshll.u32 %s152, 4
          %s160 = int_to_ptr.vmem [resolvable:$true] %s159
          %165 = dma.hbm_to_vmem [thread:$0]  %s158, 2048, %s160, %s149, 64, 64, 4
        $region28: #{tpu_custom_call.1} parent=23 // pred_fallthru
          _
      $region24: #{tpu_custom_call.1} parent=5 // pred_fallthru
        _
      %p166 = scmp.le.s32.totalorder 1, %s16
      %p167 = scmp.lt.s32.totalorder %s16, 3
      %p168 = pnand %p166, %p167
      %p169 = pneg %p168
      // Predicated region
      $region29: #{tpu_custom_call.1} parent=5 // pred_check
        _
      $region30: #{tpu_custom_call.1} parent=5 // pred_check_branch
        %171 = sbr.rel (%p168) target = $region32
      $region31: #{tpu_custom_call.1} parent=5 // pred_region
        %s172 = ssub.s32 %s16, 1
        %s173 = sand.u32 %s29, 1
        %s174 = scalar_lea.sflag [#allocation3], %s173
        %s175 = sand.u32 %s29, 1
        %s176 = smul.addr %s175, 128
        %s177 = scalar_lea.vmem [#allocation2], %s176
        // Predicated region
        $region33: #{tpu_custom_call.1} parent=31 // pred_check
          %p178 = pneg %p42
        $region34: #{tpu_custom_call.1} parent=31 // pred_check_branch
          %180 = sbr.rel (%p178) target = $region36
        $region35: #{tpu_custom_call.1} parent=31 // pred_region
          %181 = dma.done %s174, 2048
        $region36: #{tpu_custom_call.1} parent=31 // pred_fallthru
          _
        // Predicated region
        $region37: #{tpu_custom_call.1} parent=31 // pred_check
          %p182 = pneg %p63
        $region38: #{tpu_custom_call.1} parent=31 // pred_check_branch
          %184 = sbr.rel (%p182) target = $region40
        $region39: #{tpu_custom_call.1} parent=31 // pred_region
          %185 = dma.done [#allocation6], 1024
        $region40: #{tpu_custom_call.1} parent=31 // pred_fallthru
          _
        %s186 = sand.u32 %s29, 1
        %s187 = scalar_lea.sflag [#allocation3], %s186
        %s188 = sand.u32 %s29, 1
        %s189 = smul.addr %s188, 128
        %s190 = scalar_lea.vmem [#allocation2], %s189
        %p191 = pneg %p42
        %p192 = pneg %p39
        %p193 = pneg %p63
        %p194 = pneg %p60
        %p195 = pneg %p84
        %p196 = pneg %p81
        %p197 = pneg %p110
        %p198 = pneg %p107
        %s199 = sand.u32 %s97, 1
        %s200 = scalar_lea.sflag [#allocation4], %s199
        %s201 = sand.u32 %s97, 1
        %s202 = smul.addr %s201, 128
        %s203 = scalar_lea.vmem [#allocation7], %s202
        %s204 = smul.u32 32, %s21
        %s205 = smul.u32 32, %s21
        %v207 = vld [vmem:[%s177] sm:$0xf]
        %v208 = vld [vmem:[%s177 + $0x4] sm:$0xf]
        %v209 = vld [vmem:[%s177 + $0x8] sm:$0xf]
        %v210 = vld [vmem:[%s177 + $0xc] sm:$0xf]
        %v211 = vld [vmem:[%s177 + $0x10] sm:$0xf]
        %v212 = vld [vmem:[%s177 + $0x14] sm:$0xf]
        %v213 = vld [vmem:[%s177 + $0x18] sm:$0xf]
        %v214 = vld [vmem:[%s177 + $0x1c] sm:$0xf]
        %v215 = vld [vmem:[%s177 + $0x20] sm:$0xf]
        %v216 = vld [vmem:[%s177 + $0x24] sm:$0xf]
        %v217 = vld [vmem:[%s177 + $0x28] sm:$0xf]
        %v218 = vld [vmem:[%s177 + $0x2c] sm:$0xf]
        %v219 = vld [vmem:[%s177 + $0x30] sm:$0xf]
        %v220 = vld [vmem:[%s177 + $0x34] sm:$0xf]
        %v221 = vld [vmem:[%s177 + $0x38] sm:$0xf]
        %v222 = vld [vmem:[%s177 + $0x3c] sm:$0xf]
        %v223 = vld [vmem:[%s177 + $0x40] sm:$0xf]
        %v224 = vld [vmem:[%s177 + $0x44] sm:$0xf]
        %v225 = vld [vmem:[%s177 + $0x48] sm:$0xf]
        %v226 = vld [vmem:[%s177 + $0x4c] sm:$0xf]
        %v227 = vld [vmem:[%s177 + $0x50] sm:$0xf]
        %v228 = vld [vmem:[%s177 + $0x54] sm:$0xf]
        %v229 = vld [vmem:[%s177 + $0x58] sm:$0xf]
        %v230 = vld [vmem:[%s177 + $0x5c] sm:$0xf]
        %v231 = vld [vmem:[%s177 + $0x60] sm:$0xf]
        %v232 = vld [vmem:[%s177 + $0x64] sm:$0xf]
        %v233 = vld [vmem:[%s177 + $0x68] sm:$0xf]
        %v234 = vld [vmem:[%s177 + $0x6c] sm:$0xf]
        %v235 = vld [vmem:[%s177 + $0x70] sm:$0xf]
        %v236 = vld [vmem:[%s177 + $0x74] sm:$0xf]
        %v237 = vld [vmem:[%s177 + $0x78] sm:$0xf]
        %v238 = vld [vmem:[%s177 + $0x7c] sm:$0xf]
        %v239 = vld [vmem:[#allocation5] sm:$0xf]
        %v240 = vld [vmem:[#allocation5 + $0x4] sm:$0xf]
        %v241 = vld [vmem:[#allocation5 + $0x8] sm:$0xf]
        %v242 = vld [vmem:[#allocation5 + $0xc] sm:$0xf]
        %v243 = vld [vmem:[#allocation5 + $0x10] sm:$0xf]
        %v244 = vld [vmem:[#allocation5 + $0x14] sm:$0xf]
        %v245 = vld [vmem:[#allocation5 + $0x18] sm:$0xf]
        %v246 = vld [vmem:[#allocation5 + $0x1c] sm:$0xf]
        %v247 = vld [vmem:[#allocation5 + $0x20] sm:$0xf]
        %v248 = vld [vmem:[#allocation5 + $0x24] sm:$0xf]
        %v249 = vld [vmem:[#allocation5 + $0x28] sm:$0xf]
        %v250 = vld [vmem:[#allocation5 + $0x2c] sm:$0xf]
        %v251 = vld [vmem:[#allocation5 + $0x30] sm:$0xf]
        %v252 = vld [vmem:[#allocation5 + $0x34] sm:$0xf]
        %v253 = vld [vmem:[#allocation5 + $0x38] sm:$0xf]
        %v254 = vld [vmem:[#allocation5 + $0x3c] sm:$0xf]
        %v255 = vld [vmem:[%s2] sm:$0x1]
        %v257 = vlaneseq
        %v258 = vshrl.u32 %v257, 7
        %v259 = vsub.s32 0, %v258
        %v260 = vrot.slane %v255, %v259
        %v294 = vunpack.c.l.b16 %v207
        %v295 = vunpack.c.l.b16 %v208
        %v296 = vunpack.c.l.b16 %v209
        %v297 = vunpack.c.l.b16 %v210
        %v298 = vunpack.c.l.b16 %v211
        %v299 = vunpack.c.l.b16 %v212
        %v300 = vunpack.c.l.b16 %v213
        %v301 = vunpack.c.l.b16 %v214
        %v302 = vunpack.c.l.b16 %v215
        %v303 = vunpack.c.l.b16 %v216
        %v304 = vunpack.c.l.b16 %v217
        %v305 = vunpack.c.l.b16 %v218
        %v306 = vunpack.c.l.b16 %v219
        %v307 = vunpack.c.l.b16 %v220
        %v308 = vunpack.c.l.b16 %v221
        %v309 = vunpack.c.l.b16 %v222
        %v310 = vunpack.c.l.b16 %v223
        %v311 = vunpack.c.l.b16 %v224
        %v312 = vunpack.c.l.b16 %v225
        %v313 = vunpack.c.l.b16 %v226
        %v314 = vunpack.c.l.b16 %v227
        %v315 = vunpack.c.l.b16 %v228
        %v316 = vunpack.c.l.b16 %v229
        %v317 = vunpack.c.l.b16 %v230
        %v318 = vunpack.c.l.b16 %v231
        %v319 = vunpack.c.l.b16 %v232
        %v320 = vunpack.c.l.b16 %v233
        %v321 = vunpack.c.l.b16 %v234
        %v322 = vunpack.c.l.b16 %v235
        %v323 = vunpack.c.l.b16 %v236
        %v324 = vunpack.c.l.b16 %v237
        %v325 = vunpack.c.l.b16 %v238
        %v326 = vpack.c.b16 %v295, %v294
        %v327 = vpack.c.b16 %v297, %v296
        %v328 = vpack.c.b16 %v299, %v298
        %v329 = vpack.c.b16 %v301, %v300
        %v330 = vpack.c.b16 %v303, %v302
        %v331 = vpack.c.b16 %v305, %v304
        %v332 = vpack.c.b16 %v307, %v306
        %v333 = vpack.c.b16 %v309, %v308
        %v334 = vpack.c.b16 %v311, %v310
        %v335 = vpack.c.b16 %v313, %v312
        %v336 = vpack.c.b16 %v315, %v314
        %v337 = vpack.c.b16 %v317, %v316
        %v338 = vpack.c.b16 %v319, %v318
        %v339 = vpack.c.b16 %v321, %v320
        %v340 = vpack.c.b16 %v323, %v322
        %v341 = vpack.c.b16 %v325, %v324
        %v374 = vunpack.c.l.b16 %v239
        %v375 = vunpack.c.l.b16 %v240
        %v376 = vunpack.c.l.b16 %v241
        %v377 = vunpack.c.l.b16 %v242
        %v378 = vunpack.c.l.b16 %v243
        %v379 = vunpack.c.l.b16 %v244
        %v380 = vunpack.c.l.b16 %v245
        %v381 = vunpack.c.l.b16 %v246
        %v382 = vunpack.c.l.b16 %v247
        %v383 = vunpack.c.l.b16 %v248
        %v384 = vunpack.c.l.b16 %v249
        %v385 = vunpack.c.l.b16 %v250
        %v386 = vunpack.c.l.b16 %v251
        %v387 = vunpack.c.l.b16 %v252
        %v388 = vunpack.c.l.b16 %v253
        %v389 = vunpack.c.l.b16 %v254
        %v390 = vpack.c.b16 %v375, %v374
        %v391 = vpack.c.b16 %v377, %v376
        %v392 = vpack.c.b16 %v379, %v378
        %v393 = vpack.c.b16 %v381, %v380
        %v394 = vpack.c.b16 %v383, %v382
        %v395 = vpack.c.b16 %v385, %v384
        %v396 = vpack.c.b16 %v387, %v386
        %v397 = vpack.c.b16 %v389, %v388
        %406 = vmatprep.subr.bf16.mxu0 0
        %407 = vmatpush1.bf16.msra.mxu0 %v397
        %408 = vmatprep.subr.bf16.mxu0 0
        %409 = vmatpush1.bf16.msra.mxu0 %v396
        %410 = vmatprep.subr.bf16.mxu0 0
        %411 = vmatpush1.bf16.msra.mxu0 %v395
        %412 = vmatprep.subr.bf16.mxu0 0
        %413 = vmatpush1.bf16.msra.mxu0 %v394
        %414 = vmatprep.subr.bf16.mxu0 0
        %415 = vmatpush1.bf16.msra.mxu0 %v393
        %416 = vmatprep.subr.bf16.mxu0 0
        %417 = vmatpush1.bf16.msra.mxu0 %v392
        %418 = vmatprep.subr.bf16.mxu0 0
        %419 = vmatpush1.bf16.msra.mxu0 %v391
        %420 = vmatprep.subr.bf16.mxu0 0
        %421 = vmatpush1.bf16.msra.mxu0 %v390
        %422 = vmatprep.subr.bf16.mxu0 0
        %423 = vmatpush2.bf16.msra.mxu0 0
        %424 = vmatprep.subr.bf16.mxu0 0
        %425 = vmatpush2.bf16.msra.mxu0 0
        %426 = vmatprep.subr.bf16.mxu0 0
        %427 = vmatpush2.bf16.msra.mxu0 0
        %428 = vmatprep.subr.bf16.mxu0 0
        %429 = vmatpush2.bf16.msra.mxu0 0
        %430 = vmatprep.subr.bf16.mxu0 0
        %431 = vmatpush2.bf16.msra.mxu0 0
        %432 = vmatprep.subr.bf16.mxu0 0
        %433 = vmatpush2.bf16.msra.mxu0 0
        %434 = vmatprep.subr.bf16.mxu0 0
        %435 = vmatpush2.bf16.msra.mxu0 0
        %436 = vmatprep.subr.bf16.mxu0 0
        %437 = vmatpush2.bf16.msra.mxu0 0
        %438 = vmatprep.mubr.bf16.mxu0 0
        %439 = vmatmul.mubr.bf16.gmra.mxu0 %v326
        %v440 = vpop.f32.mrf.mxu0
        %v441 = vadd.f32 %v260, %v440
        %v442 = vpop.f32.mrf.mxu0
        %v443 = vpop.f32.mrf.mxu0
        %v444 = vadd.f32 %v260, %v443
        %v445 = vpop.f32.mrf.mxu0
        %446 = vmatprep.mubr.bf16.mxu0 0
        %447 = vmatmul.mubr.bf16.gmra.mxu0 %v327
        %v448 = vpop.f32.mrf.mxu0
        %v449 = vadd.f32 %v260, %v448
        %v450 = vpop.f32.mrf.mxu0
        %v451 = vpop.f32.mrf.mxu0
        %v452 = vadd.f32 %v260, %v451
        %v453 = vpop.f32.mrf.mxu0
        %454 = vmatprep.mubr.bf16.mxu0 0
        %455 = vmatmul.mubr.bf16.gmra.mxu0 %v328
        %v456 = vpop.f32.mrf.mxu0
        %v457 = vadd.f32 %v260, %v456
        %v458 = vpop.f32.mrf.mxu0
        %v459 = vpop.f32.mrf.mxu0
        %v460 = vadd.f32 %v260, %v459
        %v461 = vpop.f32.mrf.mxu0
        %462 = vmatprep.mubr.bf16.mxu0 0
        %463 = vmatmul.mubr.bf16.gmra.mxu0 %v329
        %v464 = vpop.f32.mrf.mxu0
        %v465 = vadd.f32 %v260, %v464
        %v466 = vpop.f32.mrf.mxu0
        %v467 = vpop.f32.mrf.mxu0
        %v468 = vadd.f32 %v260, %v467
        %v469 = vpop.f32.mrf.mxu0
        %470 = vmatprep.mubr.bf16.mxu0 0
        %471 = vmatmul.mubr.bf16.gmra.mxu0 %v330
        %v472 = vpop.f32.mrf.mxu0
        %v473 = vadd.f32 %v260, %v472
        %v474 = vpop.f32.mrf.mxu0
        %v475 = vpop.f32.mrf.mxu0
        %v476 = vadd.f32 %v260, %v475
        %v477 = vpop.f32.mrf.mxu0
        %478 = vmatprep.mubr.bf16.mxu0 0
        %479 = vmatmul.mubr.bf16.gmra.mxu0 %v331
        %v480 = vpop.f32.mrf.mxu0
        %v481 = vadd.f32 %v260, %v480
        %v482 = vpop.f32.mrf.mxu0
        %v483 = vpop.f32.mrf.mxu0
        %v484 = vadd.f32 %v260, %v483
        %v485 = vpop.f32.mrf.mxu0
        %486 = vmatprep.mubr.bf16.mxu0 0
        %487 = vmatmul.mubr.bf16.gmra.mxu0 %v332
        %v488 = vpop.f32.mrf.mxu0
        %v489 = vadd.f32 %v260, %v488
        %v490 = vpop.f32.mrf.mxu0
        %v491 = vpop.f32.mrf.mxu0
        %v492 = vadd.f32 %v260, %v491
        %v493 = vpop.f32.mrf.mxu0
        %494 = vmatprep.mubr.bf16.mxu0 0
        %495 = vmatmul.mubr.bf16.gmra.mxu0 %v333
        %v496 = vpop.f32.mrf.mxu0
        %v497 = vadd.f32 %v260, %v496
        %v498 = vpop.f32.mrf.mxu0
        %v499 = vpop.f32.mrf.mxu0
        %v500 = vadd.f32 %v260, %v499
        %v501 = vpop.f32.mrf.mxu0
        %502 = vmatprep.mubr.bf16.mxu0 0
        %503 = vmatmul.mubr.bf16.gmra.mxu0 %v334
        %v504 = vpop.f32.mrf.mxu0
        %v505 = vadd.f32 %v260, %v504
        %v506 = vpop.f32.mrf.mxu0
        %v507 = vpop.f32.mrf.mxu0
        %v508 = vadd.f32 %v260, %v507
        %v509 = vpop.f32.mrf.mxu0
        %510 = vmatprep.mubr.bf16.mxu0 0
        %511 = vmatmul.mubr.bf16.gmra.mxu0 %v335
        %v512 = vpop.f32.mrf.mxu0
        %v513 = vadd.f32 %v260, %v512
        %v514 = vpop.f32.mrf.mxu0
        %v515 = vpop.f32.mrf.mxu0
        %v516 = vadd.f32 %v260, %v515
        %v517 = vpop.f32.mrf.mxu0
        %518 = vmatprep.mubr.bf16.mxu0 0
        %519 = vmatmul.mubr.bf16.gmra.mxu0 %v336
        %v520 = vpop.f32.mrf.mxu0
        %v521 = vadd.f32 %v260, %v520
        %v522 = vpop.f32.mrf.mxu0
        %v523 = vpop.f32.mrf.mxu0
        %v524 = vadd.f32 %v260, %v523
        %v525 = vpop.f32.mrf.mxu0
        %526 = vmatprep.mubr.bf16.mxu0 0
        %527 = vmatmul.mubr.bf16.gmra.mxu0 %v337
        %v528 = vpop.f32.mrf.mxu0
        %v529 = vadd.f32 %v260, %v528
        %v530 = vpop.f32.mrf.mxu0
        %v531 = vpop.f32.mrf.mxu0
        %v532 = vadd.f32 %v260, %v531
        %v533 = vpop.f32.mrf.mxu0
        %534 = vmatprep.mubr.bf16.mxu0 0
        %535 = vmatmul.mubr.bf16.gmra.mxu0 %v338
        %v536 = vpop.f32.mrf.mxu0
        %v537 = vadd.f32 %v260, %v536
        %v538 = vpop.f32.mrf.mxu0
        %v539 = vpop.f32.mrf.mxu0
        %v540 = vadd.f32 %v260, %v539
        %v541 = vpop.f32.mrf.mxu0
        %542 = vmatprep.mubr.bf16.mxu0 0
        %543 = vmatmul.mubr.bf16.gmra.mxu0 %v339
        %v544 = vpop.f32.mrf.mxu0
        %v545 = vadd.f32 %v260, %v544
        %v546 = vpop.f32.mrf.mxu0
        %v547 = vpop.f32.mrf.mxu0
        %v548 = vadd.f32 %v260, %v547
        %v549 = vpop.f32.mrf.mxu0
        %550 = vmatprep.mubr.bf16.mxu0 0
        %551 = vmatmul.mubr.bf16.gmra.mxu0 %v340
        %v552 = vpop.f32.mrf.mxu0
        %v553 = vadd.f32 %v260, %v552
        %v554 = vpop.f32.mrf.mxu0
        %v555 = vpop.f32.mrf.mxu0
        %v556 = vadd.f32 %v260, %v555
        %v557 = vpop.f32.mrf.mxu0
        %558 = vmatprep.mubr.bf16.mxu0 0
        %559 = vmatmul.mubr.bf16.gmra.mxu0 %v341
        %v560 = vpop.f32.mrf.mxu0
        %v561 = vadd.f32 %v260, %v560
        %v562 = vpop.f32.mrf.mxu0
        %v563 = vpop.f32.mrf.mxu0
        %v564 = vadd.f32 %v260, %v563
        %v565 = vpop.f32.mrf.mxu0
        %566 = vdwg.mxu0
        %v567 = vpack.c.bf16 %v444, %v441
        %v568 = vpack.c.bf16 %v452, %v449
        %v569 = vpack.c.bf16 %v460, %v457
        %v570 = vpack.c.bf16 %v468, %v465
        %v571 = vpack.c.bf16 %v476, %v473
        %v572 = vpack.c.bf16 %v484, %v481
        %v573 = vpack.c.bf16 %v492, %v489
        %v574 = vpack.c.bf16 %v500, %v497
        %v575 = vpack.c.bf16 %v508, %v505
        %v576 = vpack.c.bf16 %v516, %v513
        %v577 = vpack.c.bf16 %v524, %v521
        %v578 = vpack.c.bf16 %v532, %v529
        %v579 = vpack.c.bf16 %v540, %v537
        %v580 = vpack.c.bf16 %v548, %v545
        %v581 = vpack.c.bf16 %v556, %v553
        %v582 = vpack.c.bf16 %v564, %v561
        %v599 = vunpack.c.l.b16 %v567
        %v600 = vunpack.c.h.b16 %v567
        %v601 = vunpack.c.l.b16 %v568
        %v602 = vunpack.c.h.b16 %v568
        %v603 = vunpack.c.l.b16 %v569
        %v604 = vunpack.c.h.b16 %v569
        %v605 = vunpack.c.l.b16 %v570
        %v606 = vunpack.c.h.b16 %v570
        %v607 = vunpack.c.l.b16 %v571
        %v608 = vunpack.c.h.b16 %v571
        %v609 = vunpack.c.l.b16 %v572
        %v610 = vunpack.c.h.b16 %v572
        %v611 = vunpack.c.l.b16 %v573
        %v612 = vunpack.c.h.b16 %v573
        %v613 = vunpack.c.l.b16 %v574
        %v614 = vunpack.c.h.b16 %v574
        %v615 = vunpack.c.l.b16 %v575
        %v616 = vunpack.c.h.b16 %v575
        %v617 = vunpack.c.l.b16 %v576
        %v618 = vunpack.c.h.b16 %v576
        %v619 = vunpack.c.l.b16 %v577
        %v620 = vunpack.c.h.b16 %v577
        %v621 = vunpack.c.l.b16 %v578
        %v622 = vunpack.c.h.b16 %v578
        %v623 = vunpack.c.l.b16 %v579
        %v624 = vunpack.c.h.b16 %v579
        %v625 = vunpack.c.l.b16 %v580
        %v626 = vunpack.c.h.b16 %v580
        %v627 = vunpack.c.l.b16 %v581
        %v628 = vunpack.c.h.b16 %v581
        %v629 = vunpack.c.l.b16 %v582
        %v630 = vunpack.c.h.b16 %v582
        %v631 = vpack.c.b16 %v599, %v599
        %v632 = vpack.c.b16 %v600, %v600
        %v633 = vpack.c.b16 %v601, %v601
        %v634 = vpack.c.b16 %v602, %v602
        %v635 = vpack.c.b16 %v603, %v603
        %v636 = vpack.c.b16 %v604, %v604
        %v637 = vpack.c.b16 %v605, %v605
        %v638 = vpack.c.b16 %v606, %v606
        %v639 = vpack.c.b16 %v607, %v607
        %v640 = vpack.c.b16 %v608, %v608
        %v641 = vpack.c.b16 %v609, %v609
        %v642 = vpack.c.b16 %v610, %v610
        %v643 = vpack.c.b16 %v611, %v611
        %v644 = vpack.c.b16 %v612, %v612
        %v645 = vpack.c.b16 %v613, %v613
        %v646 = vpack.c.b16 %v614, %v614
        %v647 = vpack.c.b16 %v615, %v615
        %v648 = vpack.c.b16 %v616, %v616
        %v649 = vpack.c.b16 %v617, %v617
        %v650 = vpack.c.b16 %v618, %v618
        %v651 = vpack.c.b16 %v619, %v619
        %v652 = vpack.c.b16 %v620, %v620
        %v653 = vpack.c.b16 %v621, %v621
        %v654 = vpack.c.b16 %v622, %v622
        %v655 = vpack.c.b16 %v623, %v623
        %v656 = vpack.c.b16 %v624, %v624
        %v657 = vpack.c.b16 %v625, %v625
        %v658 = vpack.c.b16 %v626, %v626
        %v659 = vpack.c.b16 %v627, %v627
        %v660 = vpack.c.b16 %v628, %v628
        %v661 = vpack.c.b16 %v629, %v629
        %v662 = vpack.c.b16 %v630, %v630
        %695 = vst [vmem:[%s203] sm:$0xf] %v631
        %696 = vst [vmem:[%s203 + $0x4] sm:$0xf] %v632
        %697 = vst [vmem:[%s203 + $0x8] sm:$0xf] %v633
        %698 = vst [vmem:[%s203 + $0xc] sm:$0xf] %v634
        %699 = vst [vmem:[%s203 + $0x10] sm:$0xf] %v635
        %700 = vst [vmem:[%s203 + $0x14] sm:$0xf] %v636
        %701 = vst [vmem:[%s203 + $0x18] sm:$0xf] %v637
        %702 = vst [vmem:[%s203 + $0x1c] sm:$0xf] %v638
        %703 = vst [vmem:[%s203 + $0x20] sm:$0xf] %v639
        %704 = vst [vmem:[%s203 + $0x24] sm:$0xf] %v640
        %705 = vst [vmem:[%s203 + $0x28] sm:$0xf] %v641
        %706 = vst [vmem:[%s203 + $0x2c] sm:$0xf] %v642
        %707 = vst [vmem:[%s203 + $0x30] sm:$0xf] %v643
        %708 = vst [vmem:[%s203 + $0x34] sm:$0xf] %v644
        %709 = vst [vmem:[%s203 + $0x38] sm:$0xf] %v645
        %710 = vst [vmem:[%s203 + $0x3c] sm:$0xf] %v646
        %711 = vst [vmem:[%s203 + $0x40] sm:$0xf] %v647
        %712 = vst [vmem:[%s203 + $0x44] sm:$0xf] %v648
        %713 = vst [vmem:[%s203 + $0x48] sm:$0xf] %v649
        %714 = vst [vmem:[%s203 + $0x4c] sm:$0xf] %v650
        %715 = vst [vmem:[%s203 + $0x50] sm:$0xf] %v651
        %716 = vst [vmem:[%s203 + $0x54] sm:$0xf] %v652
        %717 = vst [vmem:[%s203 + $0x58] sm:$0xf] %v653
        %718 = vst [vmem:[%s203 + $0x5c] sm:$0xf] %v654
        %719 = vst [vmem:[%s203 + $0x60] sm:$0xf] %v655
        %720 = vst [vmem:[%s203 + $0x64] sm:$0xf] %v656
        %721 = vst [vmem:[%s203 + $0x68] sm:$0xf] %v657
        %722 = vst [vmem:[%s203 + $0x6c] sm:$0xf] %v658
        %723 = vst [vmem:[%s203 + $0x70] sm:$0xf] %v659
        %724 = vst [vmem:[%s203 + $0x74] sm:$0xf] %v660
        %725 = vst [vmem:[%s203 + $0x78] sm:$0xf] %v661
        %726 = vst [vmem:[%s203 + $0x7c] sm:$0xf] %v662
        %s727 = sand.u32 %s97, 1
        %s728 = scalar_lea.sflag [#allocation4], %s727
        %s729 = sand.u32 %s97, 1
        %s730 = smul.addr %s729, 128
        %s731 = scalar_lea.vmem [#allocation7], %s730
        // Predicated region
        $region41: #{tpu_custom_call.1} parent=31 // pred_check
          %p732 = pneg %p107
        $region42: #{tpu_custom_call.1} parent=31 // pred_check_branch
          %734 = sbr.rel (%p732) target = $region44
        $region43: #{tpu_custom_call.1} parent=31 // pred_region
          %s735 = smul.u32 32, %s21
          %s737 = ssub.s32 2048, 2048
          %738 = vsyncadd %s728, %s737
          %s739 = smul.addr %s735, 64
          %s740 = scalar_lea.hbm %s3, %s739
          %s741 = sshll.u32 %s731, 4
          %s742 = int_to_ptr.vmem [resolvable:$true] %s741
          %747 = dma.vmem_to_hbm [thread:$0]  %s742, 2048, %s740, %s728, 64, 64, 4
        $region44: #{tpu_custom_call.1} parent=31 // pred_fallthru
          _
      $region32: #{tpu_custom_call.1} parent=5 // pred_fallthru
        _
      %p748 = scmp.le.s32.totalorder 2, %s16
      // Predicated region
      $region45: #{tpu_custom_call.1} parent=5 // pred_check
        %p749 = pneg %p748
      $region46: #{tpu_custom_call.1} parent=5 // pred_check_branch
        %751 = sbr.rel (%p749) target = $region48
      $region47: #{tpu_custom_call.1} parent=5 // pred_region
        %s752 = ssub.s32 %s16, 2
        // Predicated region
        $region49: #{tpu_custom_call.1} parent=47 // pred_check
          %p753 = pneg %p113
        $region50: #{tpu_custom_call.1} parent=47 // pred_check_branch
          %755 = sbr.rel (%p753) target = $region52
        $region51: #{tpu_custom_call.1} parent=47 // pred_region
          %s756 = sand.u32 %s98, 1
          %s757 = scalar_lea.sflag [#allocation4], %s756
          %s758 = sand.u32 %s98, 1
          %s759 = smul.addr %s758, 128
          %s760 = scalar_lea.vmem [#allocation7], %s759
          %761 = dma.done %s757, 2048
        $region52: #{tpu_custom_call.1} parent=47 // pred_fallthru
          _
      $region48: #{tpu_custom_call.1} parent=5 // pred_fallthru
        _
    $region6: #{tpu_custom_call.1} parent=1 // loop_footer
      %s20 = sadd.s32 1, %s16
    $region7: #{tpu_custom_call.1} parent=1 // loop_footer_branch
      %15 = sbr.rel target = $region3
    $region8: #{tpu_custom_call.1} parent=1 // loop_exit
      _
    %762 = vsyncpa [#allocation3], 1
    %s763 = scalar_lea.sflag [#allocation3], 1
    %764 = vsyncpa %s763, 1
    %765 = vsyncpa [#allocation6], 1
    %766 = vsyncpa [#allocation4], 1
    %s767 = scalar_lea.sflag [#allocation4], 1
    %768 = vsyncpa %s767, 1

</llo_original>
